<compile_context>
chip_gen: v6e
topology: v6e:2x2x1
jax: 0.10.0
libtpu: 0.0.40
codegen_flags: <defaults>
</compile_context>

<pallas_src>
import functools

import jax
import jax.numpy as jnp
import numpy as np
from jax.experimental import pallas as pl
from jax.experimental.pallas import tpu as pltpu


def _round_up(x, m):
    return ((x + m - 1) // m) * m


def _focal_ce_partial_kernel(logits_ref, target_ref, out_ref, *,
                             rows_in_last, num_blocks):
    """Per-block partial sum of per-sample cross-entropy.

    logits_ref: (block_rows, C) VMEM tile (native dtype, cast to f32 here)
    target_ref: (block_rows, 1) VMEM tile of int8/int16/int32 class indices
    out_ref   : (1, 1) SMEM block -> partial CE sum over this block's rows
    """
    logits = logits_ref[...].astype(jnp.float32)             # (bn, C) f32
    tgt = target_ref[...].astype(jnp.int32)                  # (bn, 1) i32
    bn, c = logits.shape

    # One-hot selection of the target logit (>=2-D iota required on TPU).
    class_ids = jax.lax.broadcasted_iota(jnp.int32, (bn, c), 1)
    onehot = class_ids == tgt                                 # (bn, C)

    # Numerically-stable CE; `shifted` is reused for both the exp and the
    # picked-logit select, and the row max cancels out of ce:
    #   ce = (m + log(sum exp(x - m))) - (m + sum(onehot * (x - m)))
    #      = log(sum exp(shifted)) - sum(onehot * shifted)
    # Everything row-wise stays (bn, 1) keepdims (natural sublane layout).
    m = jnp.max(logits, axis=1, keepdims=True)                        # (bn, 1)
    shifted = logits - m                                              # (bn, C)
    sumexp = jnp.sum(jnp.exp(shifted), axis=1, keepdims=True)         # (bn, 1)
    picked = jnp.sum(jnp.where(onehot, shifted, 0.0), axis=1,
                     keepdims=True)                                   # (bn, 1)
    ce = jnp.log(sumexp) - picked                                     # (bn, 1)

    if rows_in_last == bn:
        # N divides evenly into tiles: no masking anywhere.
        out_ref[0, 0] = jnp.sum(ce)
    else:
        # Only the last grid step pays for the ragged-row mask.
        i = pl.program_id(0)
        last = num_blocks - 1

        @pl.when(i != last)
        def _():
            out_ref[0, 0] = jnp.sum(ce)

        @pl.when(i == last)
        def _():
            row_ids = jax.lax.broadcasted_iota(jnp.int32, (bn, 1), 0)
            out_ref[0, 0] = jnp.sum(jnp.where(row_ids < rows_in_last, ce, 0.0))


def _pick_vmem_limit_bytes():
    """Scoped-VMEM limit derived from the chip: 96 MiB on 128 MiB parts
    (v5e/v6e), 48 MiB on v7x's 64 MiB, 48 MiB fallback."""
    cap = 64 * 1024 * 1024
    try:
        v = pltpu.get_tpu_info().vmem_capacity_bytes
        if v:
            cap = int(v)
    except Exception:
        pass
    return min(cap * 3 // 4, 96 * 1024 * 1024)


def _choose_block_rows(n_rows, n_classes, logits_itemsize, target_itemsize, *,
                       vmem_limit_bytes, max_rows=8192):
    """Largest row-tile whose VMEM footprint (double-buffered logits +
    lane-padded targets + ~3 f32 tile-equivalents of temporaries) fits the
    budget; then make sure the grid still has multiple steps."""
    c_pad = pl.cdiv(n_classes, 128) * 128          # lane padding in VMEM
    per_row = (2 * c_pad * logits_itemsize         # 2x double-buffered logits
               + 2 * 128 * target_itemsize         # 2x (bn,1) targets, lane-padded
               + 3 * c_pad * 4)                    # f32 cast/shifted/exp temporaries
    budget = max(int(vmem_limit_bytes * 0.75), 2 * 1024 * 1024)
    rows = budget // max(per_row, 1)
    rows = int(min(rows, max_rows))
    rows = max(32, (rows // 32) * 32)              # sublane align (f32/bf16/i16/i8)
    if n_rows > rows:
        return rows
    # Whole batch fits one tile: still split into a few grid steps so both
    # v7x TensorCores get work and DMA/compute overlap survives.
    if n_rows >= 512:
        return _round_up(pl.cdiv(n_rows, 4), 32)
    if n_rows >= 128:
        return _round_up(pl.cdiv(n_rows, 2), 32)
    return n_rows                                  # tiny: single full-extent block


def focal_loss(logits, target, gamma=0.0, block_rows=None):
    """logits: (N, C) float (f32 or bf16); target: (N,) int class indices.

    Returns the scalar focal loss (f32), matching the PyTorch module.
    """
    n, c = logits.shape
    logits_itemsize = jnp.dtype(logits.dtype).itemsize

    # Narrowest integer dtype that holds the class index: cuts the lane-padded
    # target HBM/VMEM traffic 2-4x (it is 512 B/row as int32).
    if c <= 127:
        tgt_dtype = jnp.int8
    elif c <= 32767:
        tgt_dtype = jnp.int16
    else:
        tgt_dtype = jnp.int32
    tgt_itemsize = jnp.dtype(tgt_dtype).itemsize

    vmem_limit = _pick_vmem_limit_bytes()

    if block_rows is None:
        block_rows = _choose_block_rows(n, c, logits_itemsize, tgt_itemsize,
                                        vmem_limit_bytes=vmem_limit)
    else:
        block_rows = min(int(block_rows), n)
        if block_rows < n:                         # partial tiles -> keep /32
            block_rows = max(32, (block_rows // 32) * 32)
            block_rows = min(block_rows, n)

    num_blocks = int(pl.cdiv(n, block_rows))
    rows_in_last = n - (num_blocks - 1) * block_rows

    target2d = target.astype(tgt_dtype).reshape(n, 1)

    kernel = functools.partial(_focal_ce_partial_kernel,
                               rows_in_last=rows_in_last,
                               num_blocks=num_blocks)

    partials = pl.pallas_call(
        kernel,
        grid=(num_blocks,),
        out_shape=jax.ShapeDtypeStruct((num_blocks, 1), jnp.float32),
        in_specs=[
            pl.BlockSpec((block_rows, c), lambda i: (i, 0)),   # logits tile
            pl.BlockSpec((block_rows, 1), lambda i: (i, 0)),   # target tile
        ],
        out_specs=pl.BlockSpec((1, 1), lambda i: (i, 0),
                               memory_space=pltpu.MemorySpace.SMEM),
        compiler_params=pltpu.CompilerParams(
            # Each step writes its own output block -> truly parallel
            # (lets v7x's 2 TensorCores split the batch).
            dimension_semantics=("parallel",),
            vmem_limit_bytes=vmem_limit,
        ),
    )(logits, target2d)

    # Tiny epilogue on (num_blocks,) partials: mean CE + focal modulation.
    ce_sum = jnp.sum(partials)
    logp = ce_sum / jnp.float32(n)
    p = jnp.exp(-logp)
    # Clamp: p can round to slightly > 1 when mean CE ~ 0; (negative)^gamma
    # would NaN for non-integer gamma.
    loss = jnp.power(jnp.maximum(1.0 - p, 0.0), jnp.float32(gamma)) * logp
    return loss


def _focal_loss_ref(logits, target, gamma=0.0):
    """Pure-JAX reference mirroring torch.nn.CrossEntropyLoss + focal term."""
    logits = logits.astype(jnp.float32)
    lse = jax.scipy.special.logsumexp(logits, axis=1)
    picked = jnp.take_along_axis(
        logits, target[:, None].astype(jnp.int32), axis=1)[:, 0]
    logp = jnp.mean(lse - picked)
    p = jnp.exp(-logp)
    return jnp.power(1.0 - p, gamma) * logp


if __name__ == "__main__":
    key = jax.random.PRNGKey(0)
    k1, k2, k3, k4, k5, k6 = jax.random.split(key, 6)

    # Case 1: small classification batch, single full-extent block (int8 tgt).
    N1, C1 = 8, 32
    logits1 = jax.random.normal(k1, (N1, C1), dtype=jnp.float32)
    target1 = jax.random.randint(k2, (N1,), 0, C1, dtype=jnp.int32)

    # Case 2: multi-block grid, ragged last tile, bf16 logits, int16 targets.
    N2, C2 = 200, 130
    logits2 = (jax.random.normal(k3, (N2, C2), dtype=jnp.float32) * 2.0
               ).astype(jnp.bfloat16)
    target2 = jax.random.randint(k4, (N2,), 0, C2, dtype=jnp.int32)

    # Case 3: auto tiling — batch fits one tile but gets split into 4 grid
    # steps (megacore/pipelining), int8 targets (C <= 127).
    N3, C3 = 512, 96
    logits3 = jax.random.normal(k5, (N3, C3), dtype=jnp.float32)
    target3 = jax.random.randint(k6, (N3,), 0, C3, dtype=jnp.int32)

    for gamma in (0.0, 2.0):          # gamma=0 is the module's default
        out1 = jax.block_until_ready(focal_loss(logits1, target1, gamma=gamma))
        ref1 = _focal_loss_ref(logits1, target1, gamma=gamma)
        np.testing.assert_allclose(np.asarray(out1), np.asarray(ref1),
                                   rtol=1e-5, atol=1e-5)

        out2 = jax.block_until_ready(
            focal_loss(logits2, target2, gamma=gamma, block_rows=64))
        ref2 = _focal_loss_ref(logits2.astype(jnp.float32), target2, gamma=gamma)
        np.testing.assert_allclose(np.asarray(out2), np.asarray(ref2),
                                   rtol=2e-5, atol=2e-5)

        out3 = jax.block_until_ready(focal_loss(logits3, target3, gamma=gamma))
        ref3 = _focal_loss_ref(logits3, target3, gamma=gamma)
        np.testing.assert_allclose(np.asarray(out3), np.asarray(ref3),
                                   rtol=1e-5, atol=1e-5)

    print("KERNEL_OK")
</pallas_src>

<mosaic_0001>
module attributes {stable_mosaic.version = 11 : i64} {
  func.func @_focal_ce_partial_kernel(%arg0: i32, %arg1: memref<8x32xf32, #tpu.memory_space<vmem>>, %arg2: memref<8x1xi8, #tpu.memory_space<vmem>>, %arg3: memref<1x1xf32, #tpu.memory_space<smem>>) attributes {dimension_semantics = [#tpu.dimension_semantics<parallel>], iteration_bounds = array<i64: 1>, scalar_prefetch = 0 : i64, scratch_operands = 0 : i64, tpu.core_type = #tpu.core_type<tc>, window_params = [{transform_indices = @transform_0, window_bounds = array<i64: 8, 32>}, {transform_indices = @transform_1, window_bounds = array<i64: 8, 1>}, {transform_indices = @transform_2, window_bounds = array<i64: 1, 1>}]} {
    %c0 = arith.constant 0 : index
    %c0_0 = arith.constant 0 : index
    %0 = vector.load %arg1[%c0, %c0_0] : memref<8x32xf32, #tpu.memory_space<vmem>>, vector<8x32xf32>
    %c0_1 = arith.constant 0 : index
    %c0_2 = arith.constant 0 : index
    %1 = vector.load %arg2[%c0_1, %c0_2] : memref<8x1xi8, #tpu.memory_space<vmem>>, vector<8x1xi8>
    %2 = arith.extsi %1 : vector<8x1xi8> to vector<8x1xi32>
    %3 = tpu.iota {dimensions = array<i32: 1>} : vector<8x32xi32>
    %4 = vector.broadcast %2 : vector<8x1xi32> to vector<8x32xi32>
    %5 = arith.cmpi eq, %3, %4 : vector<8x32xi32>
    %cst = arith.constant dense<0xFF800000> : vector<8xf32>
    %6 = vector.multi_reduction <maximumf>, %0, %cst [1] : vector<8x32xf32> to vector<8xf32>
    %7 = vector.shape_cast %6 : vector<8xf32> to vector<8x1xf32>
    %8 = vector.broadcast %7 : vector<8x1xf32> to vector<8x32xf32>
    %9 = arith.subf %0, %8 : vector<8x32xf32>
    %10 = math.exp %9 : vector<8x32xf32>
    %cst_3 = arith.constant dense<0.000000e+00> : vector<8xf32>
    %11 = vector.multi_reduction <add>, %10, %cst_3 [1] : vector<8x32xf32> to vector<8xf32>
    %12 = vector.shape_cast %11 : vector<8xf32> to vector<8x1xf32>
    %cst_4 = arith.constant 0.000000e+00 : f32
    %13 = vector.broadcast %cst_4 : f32 to vector<8x32xf32>
    %14 = arith.select %5, %9, %13 : vector<8x32xi1>, vector<8x32xf32>
    %cst_5 = arith.constant dense<0.000000e+00> : vector<8xf32>
    %15 = vector.multi_reduction <add>, %14, %cst_5 [1] : vector<8x32xf32> to vector<8xf32>
    %16 = vector.shape_cast %15 : vector<8xf32> to vector<8x1xf32>
    %17 = math.log %12 : vector<8x1xf32>
    %18 = arith.subf %17, %16 : vector<8x1xf32>
    %19 = vector.shape_cast %18 : vector<8x1xf32> to vector<1x8x1xf32>
    %cst_6 = arith.constant dense<0.000000e+00> : vector<1xf32>
    %20 = vector.multi_reduction <add>, %19, %cst_6 [1, 2] : vector<1x8x1xf32> to vector<1xf32>
    %21 = vector.shape_cast %20 : vector<1xf32> to vector<1x1x1xf32>
    %22 = vector.extract %21[0, 0, 0] : f32 from vector<1x1x1xf32>
    %c0_7 = arith.constant 0 : index
    %c0_8 = arith.constant 0 : index
    %23 = memref.load %arg3[%c0_7, %c0_8] : memref<1x1xf32, #tpu.memory_space<smem>>
    memref.store %22, %arg3[%c0_7, %c0_8] : memref<1x1xf32, #tpu.memory_space<smem>>
    return
  }
  func.func @transform_0(%arg0: i32) -> (i32, i32) {
    %c0_i32 = arith.constant 0 : i32
    %c0_i32_0 = arith.constant 0 : i32
    return %arg0, %c0_i32 : i32, i32
  }
  func.func @transform_1(%arg0: i32) -> (i32, i32) {
    %c0_i32 = arith.constant 0 : i32
    %c0_i32_0 = arith.constant 0 : i32
    return %arg0, %c0_i32 : i32, i32
  }
  func.func @transform_2(%arg0: i32) -> (i32, i32) {
    %c0_i32 = arith.constant 0 : i32
    %c0_i32_0 = arith.constant 0 : i32
    return %arg0, %c0_i32 : i32, i32
  }
}

</mosaic_0001>

<llo_original>
// kernel: tpu_custom_call.1
$region0: #{tpu_custom_call.1}
  #allocation0 [shape = 'u32[]', space=smem, size = 0x4, offset = 0x4, fixed_abs, tag = 'smem constant byte address 0x4 - core index']
  #allocation1 [shape = 'u32[144,128]{1,0:T(1,128)}', space=vmem, size = 0x12000, scoped, tag = 'internal scratch']
  %s0 = inlined_call_operand.hbm [shape: f32[8,32], index: 0, kind: input, shape index: {}]
  %s1 = inlined_call_operand.vmem [shape: s8[8,1], index: 1, kind: input, shape index: {}]
  %s2 = inlined_call_operand.hbm [shape: f32[1,1], index: 2, kind: output, shape index: {}]
  %s3 = sld [smem:[#allocation0]]
  $region22: #{tpu_custom_call.1} parent=0
    _
  %s5 = ssub.s32 1, %s3
  %s6 = scalar_select 0, %s5, %s3
  $region1: #{tpu_custom_call.1} parent=0
    #allocation2 [shape = 'u8[4096]{0}', space=vmem, size = 0x1000, scoped, tag = 'input window, operand 0, single buffered']
    #allocation3 [shape = 's32[1]{0}', space=sflag, size = 0x4, scoped, tag = 'scoped memory for tpu_custom_call.1']
    #allocation4 [shape = 's32[1]{0}', space=sflag, size = 0x4, scoped, tag = 'scoped memory for tpu_custom_call.1']
    #allocation5 [shape = 'u8[512]{0}', space=smem, size = 0x200, scoped, tag = 'output window, operand 0, single buffered']
    %7 = vsyncpa [#allocation3], 0
    %8 = vsyncpa [#allocation4], 0
    // Predicated region
    $region2: #{tpu_custom_call.1} parent=1 // pred_check
      _
    $region3: #{tpu_custom_call.1} parent=1 // pred_check_branch
      %10 = sbr.rel (0) target = $region5
    $region4: #{tpu_custom_call.1} parent=1 // pred_region
      %s12 = ssub.s32 128, 128
      %13 = vsyncadd [#allocation3], %s12
      %s15 = sshll.u32 [#allocation2], 4
      %s16 = int_to_ptr.vmem [resolvable:$true] %s15
      %18 = dma.hbm_to_vmem [thread:$0]  %s0, 128, %s16, [#allocation3]
    $region5: #{tpu_custom_call.1} parent=1 // pred_fallthru
      _
    // Predicated region
    $region6: #{tpu_custom_call.1} parent=1 // pred_check
      _
    $region7: #{tpu_custom_call.1} parent=1 // pred_check_branch
      %20 = sbr.rel (0) target = $region9
    $region8: #{tpu_custom_call.1} parent=1 // pred_region
      _
    $region9: #{tpu_custom_call.1} parent=1 // pred_fallthru
      _
    // Predicated region
    $region10: #{tpu_custom_call.1} parent=1 // pred_check
      _
    $region11: #{tpu_custom_call.1} parent=1 // pred_check_branch
      %22 = sbr.rel (0) target = $region13
    $region12: #{tpu_custom_call.1} parent=1 // pred_region
      %23 = dma.done [#allocation3], 128
    $region13: #{tpu_custom_call.1} parent=1 // pred_fallthru
      _
    %v24 = vld [vmem:[#allocation2] sm:$0xff]
    %v25 = vld [vmem:[%s1] sm:$0x3]
    %v26 = vunpack.c.0.s8 %v25
    %v27 = vlaneseq
    %v28 = vand.u32 %v27, 127
    %29 = vset.pattern.permute.xlu0 0
    %30 = vperm.xlu0 %29, %v26
    %v31 = vpop.permute.xlu0 %30
    %vm32 = vcmp.eq.s32.totalorder %v28, %v31
    %vm33 = vcmask 261120
    %v34 = vsel %vm33, %v24, -inf
    %35 = vmax.xlane.f32.xlu0 %v34
    %v36 = vpop.xlane.xlu0 %35
    %v37 = vsub.f32 %v24, %v36
    %v38 = vmul.f32 %v37, 1.442695
    %v39 = vpow.pop %v38
    %v40 = vsel %vm33, %v39, 0.0
    %41 = vadd.xlane.f32.xlu0 %v40
    %v42 = vpop.xlane.xlu0 %41
    %v43 = vsel %vm32, %v37, 0.0
    %v44 = vsel %vm33, %v43, 0.0
    %45 = vadd.xlane.f32.xlu0 %v44
    %v46 = vpop.xlane.xlu0 %45
    %v47 = vlog2.pop %v42
    %v48 = vmul.f32 %v47, 0.6931472
    %v49 = vsub.f32 %v48, %v46
    %vm50 = vcmask 7168
    %v51 = vsel %vm50, %v49, 0.0
    %52 = vadd.xlane.f32.xlu0 %v51
    %v53 = vpop.xlane.xlu0 %52
    %v54 = vrot.slane %v53, 4
    %v55 = vadd.f32 %v53, %v54
    %v56 = vrot.slane %v55, 2
    %v57 = vadd.f32 %v55, %v56
    %v58 = vrot.slane %v57, 1
    %v59 = vadd.f32 %v57, %v58
    %s60 = vtos %v59
    %s61 = scalar_lea.smem [#allocation5], 0
    %62 = sst [smem:[%s61]] %s60
    // Predicated region
    $region14: #{tpu_custom_call.1} parent=1 // pred_check
      _
    $region15: #{tpu_custom_call.1} parent=1 // pred_check_branch
      %64 = sbr.rel (0) target = $region17
    $region16: #{tpu_custom_call.1} parent=1 // pred_region
      %s66 = ssub.s32 16, 16
      %67 = vsyncadd [#allocation4], %s66
      %70 = dma.smem_to_hbm [#allocation5], 16, %s2, [#allocation4]
    $region17: #{tpu_custom_call.1} parent=1 // pred_fallthru
      _
    // Predicated region
    $region18: #{tpu_custom_call.1} parent=1 // pred_check
      _
    $region19: #{tpu_custom_call.1} parent=1 // pred_check_branch
      %72 = sbr.rel (0) target = $region21
    $region20: #{tpu_custom_call.1} parent=1 // pred_region
      %73 = dma.done [#allocation4], 16
    $region21: #{tpu_custom_call.1} parent=1 // pred_fallthru
      _
    %74 = sfence
    %75 = vsyncpa [#allocation3], 1
    %76 = vsyncpa [#allocation4], 1

</llo_original>
